<compile_context>
chip_gen: v7x
topology: tpu7x:2x2x1
jax: 0.10.0
libtpu: 0.0.40
codegen_flags: <defaults>
</compile_context>

<pallas_src>
import functools

import jax
import jax.numpy as jnp
from jax.experimental import pallas as pl
from jax.experimental.pallas import tpu as pltpu

_LANES = 128
_SUBLANES = 8
# ~2 MiB per input tile: double-buffered in/out blocks plus in-kernel f32
# temporaries stay well under the 32 MiB scoped-VMEM limit requested below,
# while amortizing the ~0.35 us per-grid-step pipeline overhead.
_TARGET_TILE_BYTES = 2 * 1024 * 1024
_VMEM_LIMIT = 32 * 1024 * 1024  # default on v6e/v7x; raises v5e's 16 MiB default


def _round_up(a, b):
    return (a + b - 1) // b * b


def _tile_extent(extent, bytes_per_unit, unit):
    """Tile size along one axis.

    Returns the full extent when it fits the VMEM budget (a full-extent block
    dim is exempt from the (8,128) divisibility rule), otherwise the largest
    multiple of `unit` under the budget; the ragged tail becomes a partial
    boundary block (reads padded, out-of-bounds writes dropped).
    """
    cap = max(unit, (_TARGET_TILE_BYTES // bytes_per_unit) // unit * unit)
    return extent if extent <= cap else cap


# --------------------------- kernels ---------------------------------------


def _ln_rows_kernel(x_ref, w_ref, b_ref, o_ref, *, eps, inv_c):
    # x_ref: (TM, C). Normalize over the last (lane) axis. Used when C is
    # already lane-dense (multiple of 128) or does not divide 128.
    x = x_ref[...].astype(jnp.float32)
    mu = jnp.sum(x, axis=-1, keepdims=True) * inv_c
    xc = x - mu
    var = jnp.sum(xc * xc, axis=-1, keepdims=True) * inv_c
    inv = jax.lax.rsqrt(var + eps)
    o_ref[...] = (xc * inv * w_ref[...] + b_ref[...]).astype(o_ref.dtype)


def _ln_rows_packed_kernel(x_ref, w_ref, b_ref, seg_ref, o_ref, *, eps, c):
    # x_ref: (TM, 128); each 128-lane row packs g = 128 // c logical rows of
    # width c, so every vreg lane and every store is useful.  Segmented
    # per-row sums are one MXU matmul against a block-diagonal 0/1 matrix
    # (result comes back already broadcast within each c-lane group).  The
    # f32 operand is split into bf16 hi+lo so the reduction is exact to
    # ~2^-16 regardless of default matmul precision.
    x = x_ref[...].astype(jnp.float32)
    seg = seg_ref[...]

    def group_sum(v):
        hi = v.astype(jnp.bfloat16)
        lo = (v - hi.astype(jnp.float32)).astype(jnp.bfloat16)
        return (jnp.dot(hi, seg, preferred_element_type=jnp.float32)
                + jnp.dot(lo, seg, preferred_element_type=jnp.float32))

    inv_c = 1.0 / c
    mu = group_sum(x) * inv_c
    xc = x - mu
    var = group_sum(xc * xc) * inv_c
    inv = jax.lax.rsqrt(var + eps)
    o_ref[...] = (xc * inv * w_ref[...] + b_ref[...]).astype(o_ref.dtype)


def _ln_cfirst_kernel(x_ref, w_ref, b_ref, o_ref, *, eps, inv_c):
    # x_ref: (1, C, T). Normalize over the full-extent channel (sublane) axis;
    # H*W is lane-dense on the last axis. No transposes needed anywhere.
    x = x_ref[...].astype(jnp.float32)
    mu = jnp.sum(x, axis=1, keepdims=True) * inv_c
    xc = x - mu
    var = jnp.sum(xc * xc, axis=1, keepdims=True) * inv_c
    inv = jax.lax.rsqrt(var + eps)
    o_ref[...] = (xc * inv * w_ref[...] + b_ref[...]).astype(o_ref.dtype)


# --------------------------- wrappers ---------------------------------------


def _layernorm_last(x2d, weight, bias, eps):
    """LayerNorm over the last dim of an (N, C) array."""
    n, c = x2d.shape
    itemsize = x2d.dtype.itemsize
    packed = (c < _LANES) and (_LANES % c == 0)

    if packed:
        g = _LANES // c
        rows = pl.cdiv(n, g)
        n_pad = rows * g
        lane_w = _LANES
        # Zero-pad at most g-1 rows so the packing reshape is legal and the
        # MXU segmented sums never see garbage inside a valid physical row.
        xp = x2d if n_pad == n else jnp.pad(x2d, ((0, n_pad - n), (0, 0)))
        xp = xp.reshape(rows, lane_w)
        w2 = jnp.tile(weight.astype(jnp.float32), g).reshape(1, lane_w)
        b2 = jnp.tile(bias.astype(jnp.float32), g).reshape(1, lane_w)
        gi = jax.lax.broadcasted_iota(jnp.int32, (lane_w, lane_w), 0) // c
        gj = jax.lax.broadcasted_iota(jnp.int32, (lane_w, lane_w), 1) // c
        seg = (gi == gj).astype(jnp.bfloat16)  # block-diag ones (exact in bf16)
        kernel = functools.partial(_ln_rows_packed_kernel, eps=eps, c=c)
    else:
        rows = n
        lane_w = c
        xp = x2d
        w2 = weight.astype(jnp.float32).reshape(1, c)
        b2 = bias.astype(jnp.float32).reshape(1, c)
        kernel = functools.partial(_ln_rows_kernel, eps=eps, inv_c=1.0 / c)

    # Lane dim pads to multiples of 128 inside VMEM, budget accordingly.
    bytes_per_row = _round_up(lane_w, _LANES) * itemsize
    tm = _tile_extent(rows, bytes_per_row, _SUBLANES)

    in_specs = [
        pl.BlockSpec((tm, lane_w), lambda i: (i, 0)),
        pl.BlockSpec((1, lane_w), lambda i: (0, 0)),
        pl.BlockSpec((1, lane_w), lambda i: (0, 0)),
    ]
    args = [xp, w2, b2]
    if packed:
        in_specs.append(pl.BlockSpec((lane_w, lane_w), lambda i: (0, 0)))
        args.append(seg)

    out = pl.pallas_call(
        kernel,
        out_shape=jax.ShapeDtypeStruct((rows, lane_w), x2d.dtype),
        grid_spec=pltpu.PrefetchScalarGridSpec(
            num_scalar_prefetch=0,
            grid=(pl.cdiv(rows, tm),),
            in_specs=in_specs,
            out_specs=pl.BlockSpec((tm, lane_w), lambda i: (i, 0)),
        ),
        compiler_params=pltpu.CompilerParams(
            dimension_semantics=("parallel",),
            vmem_limit_bytes=_VMEM_LIMIT,
        ),
    )(*args)

    if packed:
        out = out.reshape(n_pad, c)
        if n_pad != n:
            out = out[:n]
    return out


def _layernorm_channels_first(x, weight, bias, eps):
    """LayerNorm over dim 1 of an NCHW tensor, kept in NCHW (no transposes)."""
    b, c, h, w = x.shape
    hw = h * w
    itemsize = x.dtype.itemsize

    x3 = x.reshape(b, c, hw)
    w3 = weight.astype(jnp.float32).reshape(1, c, 1)
    b3 = bias.astype(jnp.float32).reshape(1, c, 1)

    c_pad = _round_up(c, _SUBLANES)  # channel dim pads to sublanes in VMEM
    t_hw = _tile_extent(hw, c_pad * itemsize, _LANES)

    out = pl.pallas_call(
        functools.partial(_ln_cfirst_kernel, eps=eps, inv_c=1.0 / c),
        out_shape=jax.ShapeDtypeStruct((b, c, hw), x.dtype),
        grid_spec=pltpu.PrefetchScalarGridSpec(
            num_scalar_prefetch=0,
            grid=(b, pl.cdiv(hw, t_hw)),
            in_specs=[
                pl.BlockSpec((1, c, t_hw), lambda i, j: (i, 0, j)),
                pl.BlockSpec((1, c, 1), lambda i, j: (0, 0, 0)),
                pl.BlockSpec((1, c, 1), lambda i, j: (0, 0, 0)),
            ],
            out_specs=pl.BlockSpec((1, c, t_hw), lambda i, j: (i, 0, j)),
        ),
        compiler_params=pltpu.CompilerParams(
            dimension_semantics=("parallel", "parallel"),
            vmem_limit_bytes=_VMEM_LIMIT,
        ),
    )(x3, w3, b3)

    return out.reshape(b, c, h, w)


class LayerNormPallas:
    """Mirror of the PyTorch LayerNorm module (forward pass only)."""

    def __init__(self, normalized_shape, eps=1e-6, data_format="channels_last"):
        if data_format not in ["channels_last", "channels_first"]:
            raise NotImplementedError
        self.weight = jnp.ones((normalized_shape,), dtype=jnp.float32)
        self.bias = jnp.zeros((normalized_shape,), dtype=jnp.float32)
        self.eps = float(eps)
        self.data_format = data_format
        self.normalized_shape = (normalized_shape,)

    def __call__(self, x):
        c = self.normalized_shape[0]
        if self.data_format == "channels_last":
            orig_shape = x.shape
            assert orig_shape[-1] == c
            y = _layernorm_last(x.reshape(-1, c), self.weight, self.bias, self.eps)
            return y.reshape(orig_shape)
        else:  # channels_first, NCHW
            assert x.shape[1] == c
            return _layernorm_channels_first(x, self.weight, self.bias, self.eps)


def _ref_layernorm_last(x, w, b, eps):
    mu = jnp.mean(x, axis=-1, keepdims=True)
    var = jnp.mean((x - mu) ** 2, axis=-1, keepdims=True)
    return (x - mu) / jnp.sqrt(var + eps) * w + b


if __name__ == "__main__":
    key = jax.random.PRNGKey(0)
    k1, k2, k3 = jax.random.split(key, 3)

    # channels_last: (B, H, W, C) = (2, 8, 8, 32)  -> lane-packed path (g=4).
    x_last = jax.random.normal(k1, (2, 8, 8, 32), dtype=jnp.float32)
    ln_last = LayerNormPallas(32, eps=1e-6, data_format="channels_last")
    ln_last.weight = jnp.linspace(0.5, 1.5, 32, dtype=jnp.float32)
    ln_last.bias = jnp.linspace(-0.1, 0.1, 32, dtype=jnp.float32)
    y_last = ln_last(x_last)
    jax.block_until_ready(y_last)
    ref_last = _ref_layernorm_last(x_last, ln_last.weight, ln_last.bias, 1e-6)
    # Packed path reduces via bf16 hi+lo MXU sums: exact to ~2^-16 per element.
    assert jnp.allclose(y_last, ref_last, atol=2e-5, rtol=2e-5)

    # channels_last with ragged row count (exercises the cdiv / tail-pad path).
    x_rag = jax.random.normal(k3, (3, 5, 7, 32), dtype=jnp.float32)
    y_rag = ln_last(x_rag)
    jax.block_until_ready(y_rag)
    ref_rag = _ref_layernorm_last(x_rag, ln_last.weight, ln_last.bias, 1e-6)
    assert jnp.allclose(y_rag, ref_rag, atol=2e-5, rtol=2e-5)

    # channels_first: (B, C, H, W) = (2, 4, 16, 16) -> native NCHW kernel.
    x_first = jax.random.normal(k2, (2, 4, 16, 16), dtype=jnp.float32)
    ln_first = LayerNormPallas(4, eps=1e-6, data_format="channels_first")
    ln_first.weight = jnp.array([1.0, 0.5, 2.0, 1.5], dtype=jnp.float32)
    ln_first.bias = jnp.array([0.0, 0.1, -0.1, 0.2], dtype=jnp.float32)
    y_first = ln_first(x_first)
    jax.block_until_ready(y_first)
    u = jnp.mean(x_first, axis=1, keepdims=True)
    s = jnp.mean((x_first - u) ** 2, axis=1, keepdims=True)
    ref_first = (x_first - u) / jnp.sqrt(s + 1e-6)
    ref_first = (ln_first.weight[:, None, None] * ref_first
                 + ln_first.bias[:, None, None])
    assert jnp.allclose(y_first, ref_first, atol=1e-5, rtol=1e-5)

    print("KERNEL_OK")
</pallas_src>

<mosaic_0001>
module attributes {stable_mosaic.version = 11 : i64} {
  func.func @_ln_rows_packed_kernel(%arg0: i32, %arg1: memref<32x128xf32, #tpu.memory_space<vmem>>, %arg2: memref<1x128xf32, #tpu.memory_space<vmem>>, %arg3: memref<1x128xf32, #tpu.memory_space<vmem>>, %arg4: memref<128x128xbf16, #tpu.memory_space<vmem>>, %arg5: memref<32x128xf32, #tpu.memory_space<vmem>>) attributes {dimension_semantics = [#tpu.dimension_semantics<parallel>], iteration_bounds = array<i64: 1>, scalar_prefetch = 0 : i64, scratch_operands = 0 : i64, tpu.core_type = #tpu.core_type<tc>, window_params = [{transform_indices = @transform_0, window_bounds = array<i64: 32, 128>}, {pipeline_mode = #tpu.pipeline_mode<synchronous>, transform_indices = @transform_1, window_bounds = array<i64: 1, 128>}, {pipeline_mode = #tpu.pipeline_mode<synchronous>, transform_indices = @transform_2, window_bounds = array<i64: 1, 128>}, {pipeline_mode = #tpu.pipeline_mode<synchronous>, transform_indices = @transform_3, window_bounds = array<i64: 128, 128>}, {transform_indices = @transform_4, window_bounds = array<i64: 32, 128>}]} {
    %c0 = arith.constant 0 : index
    %c0_0 = arith.constant 0 : index
    %0 = vector.load %arg1[%c0, %c0_0] : memref<32x128xf32, #tpu.memory_space<vmem>>, vector<32x128xf32>
    %c0_1 = arith.constant 0 : index
    %c0_2 = arith.constant 0 : index
    %1 = vector.load %arg4[%c0_1, %c0_2] : memref<128x128xbf16, #tpu.memory_space<vmem>>, vector<128x128xbf16>
    %2 = arith.truncf %0 : vector<32x128xf32> to vector<32x128xbf16>
    %3 = arith.extf %2 : vector<32x128xbf16> to vector<32x128xf32>
    %4 = arith.subf %0, %3 : vector<32x128xf32>
    %5 = arith.truncf %4 : vector<32x128xf32> to vector<32x128xbf16>
    %cst = arith.constant dense<0.000000e+00> : vector<32x128xf32>
    %6 = tpu.matmul %2, %1, %cst {dimension_numbers = #tpu.dot_dimension_numbers<[1], [0], [0], [1], [0, 0, 1, 1], [], []>} : vector<32x128xbf16>, vector<128x128xbf16>, vector<32x128xf32> -> vector<32x128xf32>
    %cst_3 = arith.constant dense<0.000000e+00> : vector<32x128xf32>
    %7 = tpu.matmul %5, %1, %cst_3 {dimension_numbers = #tpu.dot_dimension_numbers<[1], [0], [0], [1], [0, 0, 1, 1], [], []>} : vector<32x128xbf16>, vector<128x128xbf16>, vector<32x128xf32> -> vector<32x128xf32>
    %8 = arith.addf %6, %7 : vector<32x128xf32>
    %cst_4 = arith.constant 3.125000e-02 : f32
    %9 = vector.broadcast %cst_4 : f32 to vector<32x128xf32>
    %10 = arith.mulf %8, %9 : vector<32x128xf32>
    %11 = arith.subf %0, %10 : vector<32x128xf32>
    %12 = arith.mulf %11, %11 : vector<32x128xf32>
    %13 = arith.truncf %12 : vector<32x128xf32> to vector<32x128xbf16>
    %14 = arith.extf %13 : vector<32x128xbf16> to vector<32x128xf32>
    %15 = arith.subf %12, %14 : vector<32x128xf32>
    %16 = arith.truncf %15 : vector<32x128xf32> to vector<32x128xbf16>
    %cst_5 = arith.constant dense<0.000000e+00> : vector<32x128xf32>
    %17 = tpu.matmul %13, %1, %cst_5 {dimension_numbers = #tpu.dot_dimension_numbers<[1], [0], [0], [1], [0, 0, 1, 1], [], []>} : vector<32x128xbf16>, vector<128x128xbf16>, vector<32x128xf32> -> vector<32x128xf32>
    %cst_6 = arith.constant dense<0.000000e+00> : vector<32x128xf32>
    %18 = tpu.matmul %16, %1, %cst_6 {dimension_numbers = #tpu.dot_dimension_numbers<[1], [0], [0], [1], [0, 0, 1, 1], [], []>} : vector<32x128xbf16>, vector<128x128xbf16>, vector<32x128xf32> -> vector<32x128xf32>
    %19 = arith.addf %17, %18 : vector<32x128xf32>
    %cst_7 = arith.constant 3.125000e-02 : f32
    %20 = vector.broadcast %cst_7 : f32 to vector<32x128xf32>
    %21 = arith.mulf %19, %20 : vector<32x128xf32>
    %cst_8 = arith.constant 9.99999997E-7 : f32
    %22 = vector.broadcast %cst_8 : f32 to vector<32x128xf32>
    %23 = arith.addf %21, %22 : vector<32x128xf32>
    %24 = math.rsqrt %23 : vector<32x128xf32>
    %25 = arith.mulf %11, %24 : vector<32x128xf32>
    %c0_9 = arith.constant 0 : index
    %c0_10 = arith.constant 0 : index
    %26 = vector.load %arg2[%c0_9, %c0_10] : memref<1x128xf32, #tpu.memory_space<vmem>>, vector<1x128xf32>
    %27 = vector.broadcast %26 : vector<1x128xf32> to vector<32x128xf32>
    %28 = arith.mulf %25, %27 : vector<32x128xf32>
    %c0_11 = arith.constant 0 : index
    %c0_12 = arith.constant 0 : index
    %29 = vector.load %arg3[%c0_11, %c0_12] : memref<1x128xf32, #tpu.memory_space<vmem>>, vector<1x128xf32>
    %30 = vector.broadcast %29 : vector<1x128xf32> to vector<32x128xf32>
    %31 = arith.addf %28, %30 : vector<32x128xf32>
    %c0_13 = arith.constant 0 : index
    %c0_14 = arith.constant 0 : index
    %32 = vector.load %arg5[%c0_13, %c0_14] : memref<32x128xf32, #tpu.memory_space<vmem>>, vector<32x128xf32>
    tpu.vector_store %arg5[%c0_13, %c0_14], %31 {strides = array<i32>} : memref<32x128xf32, #tpu.memory_space<vmem>>, vector<32x128xf32>,
    return
  }
  func.func @transform_0(%arg0: i32) -> (i32, i32) {
    %c0_i32 = arith.constant 0 : i32
    %c0_i32_0 = arith.constant 0 : i32
    return %arg0, %c0_i32 : i32, i32
  }
  func.func @transform_1(%arg0: i32) -> (i32, i32) {
    %c0_i32 = arith.constant 0 : i32
    %c0_i32_0 = arith.constant 0 : i32
    %c0_i32_1 = arith.constant 0 : i32
    return %c0_i32, %c0_i32_0 : i32, i32
  }
  func.func @transform_2(%arg0: i32) -> (i32, i32) {
    %c0_i32 = arith.constant 0 : i32
    %c0_i32_0 = arith.constant 0 : i32
    %c0_i32_1 = arith.constant 0 : i32
    return %c0_i32, %c0_i32_0 : i32, i32
  }
  func.func @transform_3(%arg0: i32) -> (i32, i32) {
    %c0_i32 = arith.constant 0 : i32
    %c0_i32_0 = arith.constant 0 : i32
    %c0_i32_1 = arith.constant 0 : i32
    return %c0_i32, %c0_i32_0 : i32, i32
  }
  func.func @transform_4(%arg0: i32) -> (i32, i32) {
    %c0_i32 = arith.constant 0 : i32
    %c0_i32_0 = arith.constant 0 : i32
    return %arg0, %c0_i32 : i32, i32
  }
}

</mosaic_0001>

<llo_original>
// kernel: tpu_custom_call.1
$region0: #{tpu_custom_call.1}
  #allocation0 [shape = 'u32[]', space=smem, size = 0x4, offset = 0x4, fixed_abs, tag = 'smem constant byte address 0x4 - core index']
  #allocation1 [shape = 'u32[144,128]{1,0:T(1,128)}', space=vmem, size = 0x12000, scoped, tag = 'internal scratch']
  %s0 = inlined_call_operand.hbm [shape: f32[32,128], index: 0, kind: input, shape index: {}]
  %s1 = inlined_call_operand.vmem [shape: f32[1,128], index: 1, kind: input, shape index: {}]
  %s2 = inlined_call_operand.vmem [shape: f32[1,128], index: 2, kind: input, shape index: {}]
  %s3 = inlined_call_operand.hbm [shape: bf16[128,128], index: 3, kind: input, shape index: {}]
  %s4 = inlined_call_operand.hbm [shape: f32[32,128], index: 4, kind: output, shape index: {}]
  %s5 = sld [smem:[#allocation0]]
  $region34: #{tpu_custom_call.1} parent=0
    _
  %s7 = ssub.s32 1, %s5
  %s8 = scalar_select 0, %s7, %s5
  $region1: #{tpu_custom_call.1} parent=0
    #allocation2 [shape = 'u8[16384]{0}', space=vmem, size = 0x4000, scoped, tag = 'input window, operand 0, single buffered']
    #allocation3 [shape = 's32[1]{0}', space=sflag, size = 0x4, scoped, tag = 'scoped memory for tpu_custom_call.1']
    #allocation4 [shape = 's32[1]{0}', space=sflag, size = 0x4, scoped, tag = 'scoped memory for tpu_custom_call.1']
    #allocation5 [shape = 'u8[32768]{0}', space=vmem, size = 0x8000, scoped, tag = 'input window, operand 3, single buffered']
    #allocation6 [shape = 's32[1]{0}', space=sflag, size = 0x4, scoped, tag = 'scoped memory for tpu_custom_call.1']
    #allocation7 [shape = 'u8[16384]{0}', space=vmem, size = 0x4000, scoped, tag = 'output window, operand 0, single buffered']
    %9 = vsyncpa [#allocation3], 0
    %10 = vsyncpa [#allocation6], 0
    %11 = vsyncpa [#allocation4], 0
    // Predicated region
    $region2: #{tpu_custom_call.1} parent=1 // pred_check
      _
    $region3: #{tpu_custom_call.1} parent=1 // pred_check_branch
      %13 = sbr.rel (0) target = $region5
    $region4: #{tpu_custom_call.1} parent=1 // pred_region
      %s15 = ssub.s32 512, 512
      %16 = vsyncadd [#allocation3], %s15
      %s17 = sshll.u32 [#allocation2], 4
      %s18 = int_to_ptr.vmem [resolvable:$true] %s17
      %23 = dma.hbm_to_vmem [thread:$0]  %s0, 512, %s18, [#allocation3], 128, 128, 8
    $region5: #{tpu_custom_call.1} parent=1 // pred_fallthru
      _
    // Predicated region
    $region6: #{tpu_custom_call.1} parent=1 // pred_check
      _
    $region7: #{tpu_custom_call.1} parent=1 // pred_check_branch
      %25 = sbr.rel (0) target = $region9
    $region8: #{tpu_custom_call.1} parent=1 // pred_region
      _
    $region9: #{tpu_custom_call.1} parent=1 // pred_fallthru
      _
    // Predicated region
    $region10: #{tpu_custom_call.1} parent=1 // pred_check
      _
    $region11: #{tpu_custom_call.1} parent=1 // pred_check_branch
      %27 = sbr.rel (0) target = $region13
    $region12: #{tpu_custom_call.1} parent=1 // pred_region
      _
    $region13: #{tpu_custom_call.1} parent=1 // pred_fallthru
      _
    // Predicated region
    $region14: #{tpu_custom_call.1} parent=1 // pred_check
      _
    $region15: #{tpu_custom_call.1} parent=1 // pred_check_branch
      %29 = sbr.rel (0) target = $region17
    $region16: #{tpu_custom_call.1} parent=1 // pred_region
      %s31 = ssub.s32 1024, 1024
      %32 = vsyncadd [#allocation6], %s31
      %s33 = sshll.u32 [#allocation5], 4
      %s34 = int_to_ptr.vmem [resolvable:$true] %s33
      %39 = dma.hbm_to_vmem [thread:$0]  %s3, 1024, %s34, [#allocation6], 64, 64, 4
    $region17: #{tpu_custom_call.1} parent=1 // pred_fallthru
      _
    // Predicated region
    $region18: #{tpu_custom_call.1} parent=1 // pred_check
      _
    $region19: #{tpu_custom_call.1} parent=1 // pred_check_branch
      %41 = sbr.rel (0) target = $region21
    $region20: #{tpu_custom_call.1} parent=1 // pred_region
      %42 = dma.done [#allocation3], 512
    $region21: #{tpu_custom_call.1} parent=1 // pred_fallthru
      _
    // Predicated region
    $region22: #{tpu_custom_call.1} parent=1 // pred_check
      _
    $region23: #{tpu_custom_call.1} parent=1 // pred_check_branch
      %44 = sbr.rel (0) target = $region25
    $region24: #{tpu_custom_call.1} parent=1 // pred_region
      %45 = dma.done [#allocation6], 1024
    $region25: #{tpu_custom_call.1} parent=1 // pred_fallthru
      _
    %v47 = vld [vmem:[#allocation2] sm:$0xff]
    %v48 = vld [vmem:[#allocation2 + $0x8] sm:$0xff]
    %v49 = vld [vmem:[#allocation2 + $0x10] sm:$0xff]
    %v50 = vld [vmem:[#allocation2 + $0x18] sm:$0xff]
    %v51 = vld [vmem:[#allocation5] sm:$0xf]
    %v52 = vld [vmem:[#allocation5 + $0x4] sm:$0xf]
    %v53 = vld [vmem:[#allocation5 + $0x8] sm:$0xf]
    %v54 = vld [vmem:[#allocation5 + $0xc] sm:$0xf]
    %v55 = vld [vmem:[#allocation5 + $0x10] sm:$0xf]
    %v56 = vld [vmem:[#allocation5 + $0x14] sm:$0xf]
    %v57 = vld [vmem:[#allocation5 + $0x18] sm:$0xf]
    %v58 = vld [vmem:[#allocation5 + $0x1c] sm:$0xf]
    %v59 = vld [vmem:[#allocation5 + $0x20] sm:$0xf]
    %v60 = vld [vmem:[#allocation5 + $0x24] sm:$0xf]
    %v61 = vld [vmem:[#allocation5 + $0x28] sm:$0xf]
    %v62 = vld [vmem:[#allocation5 + $0x2c] sm:$0xf]
    %v63 = vld [vmem:[#allocation5 + $0x30] sm:$0xf]
    %v64 = vld [vmem:[#allocation5 + $0x34] sm:$0xf]
    %v65 = vld [vmem:[#allocation5 + $0x38] sm:$0xf]
    %v66 = vld [vmem:[#allocation5 + $0x3c] sm:$0xf]
    %v67 = vpack.c.bf16 %v48, %v47
    %v68 = vpack.c.bf16 %v50, %v49
    %v69 = vunpack.c.l.bf16 %v67
    %v70 = vunpack.c.h.bf16 %v67
    %v71 = vunpack.c.l.bf16 %v68
    %v72 = vunpack.c.h.bf16 %v68
    %v73 = vsub.f32 %v47, %v69
    %v74 = vsub.f32 %v48, %v70
    %v75 = vsub.f32 %v49, %v71
    %v76 = vsub.f32 %v50, %v72
    %v77 = vpack.c.bf16 %v74, %v73
    %v78 = vpack.c.bf16 %v76, %v75
    %v95 = vunpack.c.l.b16 %v51
    %v96 = vunpack.c.l.b16 %v52
    %v97 = vunpack.c.l.b16 %v53
    %v98 = vunpack.c.l.b16 %v54
    %v99 = vunpack.c.l.b16 %v55
    %v100 = vunpack.c.l.b16 %v56
    %v101 = vunpack.c.l.b16 %v57
    %v102 = vunpack.c.l.b16 %v58
    %v103 = vunpack.c.l.b16 %v59
    %v104 = vunpack.c.l.b16 %v60
    %v105 = vunpack.c.l.b16 %v61
    %v106 = vunpack.c.l.b16 %v62
    %v107 = vunpack.c.l.b16 %v63
    %v108 = vunpack.c.l.b16 %v64
    %v109 = vunpack.c.l.b16 %v65
    %v110 = vunpack.c.l.b16 %v66
    %v111 = vpack.c.b16 %v96, %v95
    %v112 = vpack.c.b16 %v98, %v97
    %v113 = vpack.c.b16 %v100, %v99
    %v114 = vpack.c.b16 %v102, %v101
    %v115 = vpack.c.b16 %v104, %v103
    %v116 = vpack.c.b16 %v106, %v105
    %v117 = vpack.c.b16 %v108, %v107
    %v118 = vpack.c.b16 %v110, %v109
    %127 = vmatprep.subr.bf16.mxu0 0
    %128 = vmatpush1.bf16.msra.mxu0 %v111
    %129 = vmatprep.subr.bf16.mxu0 0
    %130 = vmatpush1.bf16.msra.mxu0 %v112
    %131 = vmatprep.subr.bf16.mxu0 0
    %132 = vmatpush1.bf16.msra.mxu0 %v113
    %133 = vmatprep.subr.bf16.mxu0 0
    %134 = vmatpush1.bf16.msra.mxu0 %v114
    %135 = vmatprep.subr.bf16.mxu0 0
    %136 = vmatpush1.bf16.msra.mxu0 %v115
    %137 = vmatprep.subr.bf16.mxu0 0
    %138 = vmatpush1.bf16.msra.mxu0 %v116
    %139 = vmatprep.subr.bf16.mxu0 0
    %140 = vmatpush1.bf16.msra.mxu0 %v117
    %141 = vmatprep.subr.bf16.mxu0 0
    %142 = vmatpush1.bf16.msra.mxu0 %v118
    %143 = vmatprep.subr.bf16.mxu0 0
    %144 = vmatpush1.bf16.msra.mxu0 0
    %145 = vmatprep.subr.bf16.mxu0 0
    %146 = vmatpush1.bf16.msra.mxu0 0
    %147 = vmatprep.subr.bf16.mxu0 0
    %148 = vmatpush1.bf16.msra.mxu0 0
    %149 = vmatprep.subr.bf16.mxu0 0
    %150 = vmatpush1.bf16.msra.mxu0 0
    %151 = vmatprep.subr.bf16.mxu0 0
    %152 = vmatpush1.bf16.msra.mxu0 0
    %153 = vmatprep.subr.bf16.mxu0 0
    %154 = vmatpush1.bf16.msra.mxu0 0
    %155 = vmatprep.subr.bf16.mxu0 0
    %156 = vmatpush1.bf16.msra.mxu0 0
    %157 = vmatprep.subr.bf16.mxu0 0
    %158 = vmatpush1.bf16.msra.mxu0 0
    %159 = vmatprep.mubr.bf16.mxu0 0
    %160 = vmatmul.mubr.bf16.gmra.mrb[0].mxu0 %v77
    %v161 = vpop.f32.mrb[0].mxu0
    %v162 = vadd.f32 0.0, %v161
    %v163 = vpop.f32.mrb[0].mxu0
    %v164 = vpop.f32.mrb[0].mxu0
    %v165 = vadd.f32 0.0, %v164
    %v166 = vpop.f32.mrb[0].mxu0
    %167 = vmatprep.mubr.bf16.mxu0 0
    %168 = vmatmul.mubr.bf16.gmra.mrb[0].mxu0 %v78
    %v169 = vpop.f32.mrb[0].mxu0
    %v170 = vadd.f32 0.0, %v169
    %v171 = vpop.f32.mrb[0].mxu0
    %v172 = vpop.f32.mrb[0].mxu0
    %v173 = vadd.f32 0.0, %v172
    %v174 = vpop.f32.mrb[0].mxu0
    %175 = vdwg.mxu0
    %176 = vmatprep.subr.bf16.mxu0 0
    %177 = vmatpush1.bf16.msra.mxu0 %v111
    %178 = vmatprep.subr.bf16.mxu0 0
    %179 = vmatpush1.bf16.msra.mxu0 %v112
    %180 = vmatprep.subr.bf16.mxu0 0
    %181 = vmatpush1.bf16.msra.mxu0 %v113
    %182 = vmatprep.subr.bf16.mxu0 0
    %183 = vmatpush1.bf16.msra.mxu0 %v114
    %184 = vmatprep.subr.bf16.mxu0 0
    %185 = vmatpush1.bf16.msra.mxu0 %v115
    %186 = vmatprep.subr.bf16.mxu0 0
    %187 = vmatpush1.bf16.msra.mxu0 %v116
    %188 = vmatprep.subr.bf16.mxu0 0
    %189 = vmatpush1.bf16.msra.mxu0 %v117
    %190 = vmatprep.subr.bf16.mxu0 0
    %191 = vmatpush1.bf16.msra.mxu0 %v118
    %192 = vmatprep.subr.bf16.mxu0 0
    %193 = vmatpush1.bf16.msra.mxu0 0
    %194 = vmatprep.subr.bf16.mxu0 0
    %195 = vmatpush1.bf16.msra.mxu0 0
    %196 = vmatprep.subr.bf16.mxu0 0
    %197 = vmatpush1.bf16.msra.mxu0 0
    %198 = vmatprep.subr.bf16.mxu0 0
    %199 = vmatpush1.bf16.msra.mxu0 0
    %200 = vmatprep.subr.bf16.mxu0 0
    %201 = vmatpush1.bf16.msra.mxu0 0
    %202 = vmatprep.subr.bf16.mxu0 0
    %203 = vmatpush1.bf16.msra.mxu0 0
    %204 = vmatprep.subr.bf16.mxu0 0
    %205 = vmatpush1.bf16.msra.mxu0 0
    %206 = vmatprep.subr.bf16.mxu0 0
    %207 = vmatpush1.bf16.msra.mxu0 0
    %208 = vmatprep.mubr.bf16.mxu0 0
    %209 = vmatmul.mubr.bf16.gmra.mrb[0].mxu0 %v67
    %v210 = vpop.f32.mrb[0].mxu0
    %v211 = vadd.f32 %v162, %v210
    %v212 = vpop.f32.mrb[0].mxu0
    %v213 = vpop.f32.mrb[0].mxu0
    %v214 = vadd.f32 %v165, %v213
    %v215 = vpop.f32.mrb[0].mxu0
    %216 = vmatprep.mubr.bf16.mxu0 0
    %217 = vmatmul.mubr.bf16.gmra.mrb[0].mxu0 %v68
    %v218 = vpop.f32.mrb[0].mxu0
    %v219 = vadd.f32 %v170, %v218
    %v220 = vpop.f32.mrb[0].mxu0
    %v221 = vpop.f32.mrb[0].mxu0
    %v222 = vadd.f32 %v173, %v221
    %v223 = vpop.f32.mrb[0].mxu0
    %224 = vdwg.mxu0
    %v225 = vmul.f32 %v211, 0.03125
    %v226 = vmul.f32 %v214, 0.03125
    %v227 = vmul.f32 %v219, 0.03125
    %v228 = vmul.f32 %v222, 0.03125
    %v229 = vsub.f32 %v47, %v225
    %v230 = vsub.f32 %v48, %v226
    %v231 = vsub.f32 %v49, %v227
    %v232 = vsub.f32 %v50, %v228
    %v233 = vmul.f32 %v229, %v229
    %v234 = vmul.f32 %v230, %v230
    %v235 = vmul.f32 %v231, %v231
    %v236 = vmul.f32 %v232, %v232
    %v237 = vpack.c.bf16 %v234, %v233
    %v238 = vpack.c.bf16 %v236, %v235
    %v239 = vunpack.c.l.bf16 %v237
    %v240 = vunpack.c.h.bf16 %v237
    %v241 = vunpack.c.l.bf16 %v238
    %v242 = vunpack.c.h.bf16 %v238
    %v243 = vsub.f32 %v233, %v239
    %v244 = vsub.f32 %v234, %v240
    %v245 = vsub.f32 %v235, %v241
    %v246 = vsub.f32 %v236, %v242
    %v247 = vpack.c.bf16 %v244, %v243
    %v248 = vpack.c.bf16 %v246, %v245
    %249 = vmatprep.subr.bf16.mxu0 0
    %250 = vmatpush1.bf16.msra.mxu0 %v111
    %251 = vmatprep.subr.bf16.mxu0 0
    %252 = vmatpush1.bf16.msra.mxu0 %v112
    %253 = vmatprep.subr.bf16.mxu0 0
    %254 = vmatpush1.bf16.msra.mxu0 %v113
    %255 = vmatprep.subr.bf16.mxu0 0
    %256 = vmatpush1.bf16.msra.mxu0 %v114
    %257 = vmatprep.subr.bf16.mxu0 0
    %258 = vmatpush1.bf16.msra.mxu0 %v115
    %259 = vmatprep.subr.bf16.mxu0 0
    %260 = vmatpush1.bf16.msra.mxu0 %v116
    %261 = vmatprep.subr.bf16.mxu0 0
    %262 = vmatpush1.bf16.msra.mxu0 %v117
    %263 = vmatprep.subr.bf16.mxu0 0
    %264 = vmatpush1.bf16.msra.mxu0 %v118
    %265 = vmatprep.subr.bf16.mxu0 0
    %266 = vmatpush1.bf16.msra.mxu0 0
    %267 = vmatprep.subr.bf16.mxu0 0
    %268 = vmatpush1.bf16.msra.mxu0 0
    %269 = vmatprep.subr.bf16.mxu0 0
    %270 = vmatpush1.bf16.msra.mxu0 0
    %271 = vmatprep.subr.bf16.mxu0 0
    %272 = vmatpush1.bf16.msra.mxu0 0
    %273 = vmatprep.subr.bf16.mxu0 0
    %274 = vmatpush1.bf16.msra.mxu0 0
    %275 = vmatprep.subr.bf16.mxu0 0
    %276 = vmatpush1.bf16.msra.mxu0 0
    %277 = vmatprep.subr.bf16.mxu0 0
    %278 = vmatpush1.bf16.msra.mxu0 0
    %279 = vmatprep.subr.bf16.mxu0 0
    %280 = vmatpush1.bf16.msra.mxu0 0
    %281 = vmatprep.mubr.bf16.mxu0 0
    %282 = vmatmul.mubr.bf16.gmra.mrb[0].mxu0 %v247
    %v283 = vpop.f32.mrb[0].mxu0
    %v284 = vadd.f32 0.0, %v283
    %v285 = vpop.f32.mrb[0].mxu0
    %v286 = vpop.f32.mrb[0].mxu0
    %v287 = vadd.f32 0.0, %v286
    %v288 = vpop.f32.mrb[0].mxu0
    %289 = vmatprep.mubr.bf16.mxu0 0
    %290 = vmatmul.mubr.bf16.gmra.mrb[0].mxu0 %v248
    %v291 = vpop.f32.mrb[0].mxu0
    %v292 = vadd.f32 0.0, %v291
    %v293 = vpop.f32.mrb[0].mxu0
    %v294 = vpop.f32.mrb[0].mxu0
    %v295 = vadd.f32 0.0, %v294
    %v296 = vpop.f32.mrb[0].mxu0
    %297 = vdwg.mxu0
    %298 = vmatprep.subr.bf16.mxu0 0
    %299 = vmatpush1.bf16.msra.mxu0 %v111
    %300 = vmatprep.subr.bf16.mxu0 0
    %301 = vmatpush1.bf16.msra.mxu0 %v112
    %302 = vmatprep.subr.bf16.mxu0 0
    %303 = vmatpush1.bf16.msra.mxu0 %v113
    %304 = vmatprep.subr.bf16.mxu0 0
    %305 = vmatpush1.bf16.msra.mxu0 %v114
    %306 = vmatprep.subr.bf16.mxu0 0
    %307 = vmatpush1.bf16.msra.mxu0 %v115
    %308 = vmatprep.subr.bf16.mxu0 0
    %309 = vmatpush1.bf16.msra.mxu0 %v116
    %310 = vmatprep.subr.bf16.mxu0 0
    %311 = vmatpush1.bf16.msra.mxu0 %v117
    %312 = vmatprep.subr.bf16.mxu0 0
    %313 = vmatpush1.bf16.msra.mxu0 %v118
    %314 = vmatprep.subr.bf16.mxu0 0
    %315 = vmatpush1.bf16.msra.mxu0 0
    %316 = vmatprep.subr.bf16.mxu0 0
    %317 = vmatpush1.bf16.msra.mxu0 0
    %318 = vmatprep.subr.bf16.mxu0 0
    %319 = vmatpush1.bf16.msra.mxu0 0
    %320 = vmatprep.subr.bf16.mxu0 0
    %321 = vmatpush1.bf16.msra.mxu0 0
    %322 = vmatprep.subr.bf16.mxu0 0
    %323 = vmatpush1.bf16.msra.mxu0 0
    %324 = vmatprep.subr.bf16.mxu0 0
    %325 = vmatpush1.bf16.msra.mxu0 0
    %326 = vmatprep.subr.bf16.mxu0 0
    %327 = vmatpush1.bf16.msra.mxu0 0
    %328 = vmatprep.subr.bf16.mxu0 0
    %329 = vmatpush1.bf16.msra.mxu0 0
    %330 = vmatprep.mubr.bf16.mxu0 0
    %331 = vmatmul.mubr.bf16.gmra.mrb[0].mxu0 %v237
    %v332 = vpop.f32.mrb[0].mxu0
    %v333 = vadd.f32 %v284, %v332
    %v334 = vpop.f32.mrb[0].mxu0
    %v335 = vpop.f32.mrb[0].mxu0
    %v336 = vadd.f32 %v287, %v335
    %v337 = vpop.f32.mrb[0].mxu0
    %338 = vmatprep.mubr.bf16.mxu0 0
    %339 = vmatmul.mubr.bf16.gmra.mrb[0].mxu0 %v238
    %v340 = vpop.f32.mrb[0].mxu0
    %v341 = vadd.f32 %v292, %v340
    %v342 = vpop.f32.mrb[0].mxu0
    %v343 = vpop.f32.mrb[0].mxu0
    %v344 = vadd.f32 %v295, %v343
    %v345 = vpop.f32.mrb[0].mxu0
    %346 = vdwg.mxu0
    %v347 = vmul.f32 %v333, 0.03125
    %v348 = vmul.f32 %v336, 0.03125
    %v349 = vmul.f32 %v341, 0.03125
    %v350 = vmul.f32 %v344, 0.03125
    %v351 = vadd.f32 %v347, 1e-06
    %v352 = vadd.f32 %v348, 1e-06
    %v353 = vadd.f32 %v349, 1e-06
    %v354 = vadd.f32 %v350, 1e-06
    %v355 = vrsqrt.pop %v351
    %v356 = vrsqrt.pop %v352
    %v357 = vrsqrt.pop %v353
    %v358 = vrsqrt.pop %v354
    %v359 = vmul.f32 %v229, %v355
    %v360 = vmul.f32 %v230, %v356
    %v361 = vmul.f32 %v231, %v357
    %v362 = vmul.f32 %v232, %v358
    %v363 = vld [vmem:[%s1] sm:$0x1]
    %v365 = vlaneseq
    %v366 = vshrl.u32 %v365, 7
    %v367 = vsub.s32 0, %v366
    %v368 = vrot.slane %v363, %v367
    %v370 = vmul.f32 %v359, %v368
    %v371 = vmul.f32 %v360, %v368
    %v372 = vmul.f32 %v361, %v368
    %v373 = vmul.f32 %v362, %v368
    %v374 = vld [vmem:[%s2] sm:$0x1]
    %v376 = vlaneseq
    %v377 = vshrl.u32 %v376, 7
    %v378 = vsub.s32 0, %v377
    %v379 = vrot.slane %v374, %v378
    %v381 = vadd.f32 %v370, %v379
    %v382 = vadd.f32 %v371, %v379
    %v383 = vadd.f32 %v372, %v379
    %v384 = vadd.f32 %v373, %v379
    %385 = vst [vmem:[#allocation7] sm:$0xff] %v381
    %386 = vst [vmem:[#allocation7 + $0x8] sm:$0xff] %v382
    %387 = vst [vmem:[#allocation7 + $0x10] sm:$0xff] %v383
    %388 = vst [vmem:[#allocation7 + $0x18] sm:$0xff] %v384
    // Predicated region
    $region26: #{tpu_custom_call.1} parent=1 // pred_check
      _
    $region27: #{tpu_custom_call.1} parent=1 // pred_check_branch
      %390 = sbr.rel (0) target = $region29
    $region28: #{tpu_custom_call.1} parent=1 // pred_region
      %s392 = ssub.s32 512, 512
      %393 = vsyncadd [#allocation4], %s392
      %s394 = sshll.u32 [#allocation7], 4
      %s395 = int_to_ptr.vmem [resolvable:$true] %s394
      %400 = dma.vmem_to_hbm [thread:$0]  %s395, 512, %s4, [#allocation4], 128, 128, 8
    $region29: #{tpu_custom_call.1} parent=1 // pred_fallthru
      _
    // Predicated region
    $region30: #{tpu_custom_call.1} parent=1 // pred_check
      _
    $region31: #{tpu_custom_call.1} parent=1 // pred_check_branch
      %402 = sbr.rel (0) target = $region33
    $region32: #{tpu_custom_call.1} parent=1 // pred_region
      %403 = dma.done [#allocation4], 512
    $region33: #{tpu_custom_call.1} parent=1 // pred_fallthru
      _
    %404 = vsyncpa [#allocation3], 1
    %405 = vsyncpa [#allocation6], 1
    %406 = vsyncpa [#allocation4], 1

</llo_original>
